<compile_context>
chip_gen: v6e
topology: v6e:2x2x1
jax: 0.10.0
libtpu: 0.0.40
codegen_flags: <defaults>
</compile_context>

<pallas_src>
import jax
import jax.numpy as jnp
from jax.experimental import pallas as pl
from jax.experimental.pallas import tpu as pltpu


# ---------------------------------------------------------------------------
# Kernel: one batch element per grid step.
#   x_ref : (1, C, HW)   activations, spatial flattened (lane-dense)
#   w_ref : (c_out, C)   banded weight matrix (all branches fused)
#   b_ref : (c_out, 1)   per-branch bias (broadcasts over the lane axis)
#   o_ref : (1, c_out, HW)
# ---------------------------------------------------------------------------
def _neigh_conv_kernel(x_ref, w_ref, b_ref, o_ref):
    x = x_ref[0].astype(jnp.float32)                                   # (C, HW)
    out = jnp.dot(w_ref[...], x, preferred_element_type=jnp.float32)   # (c_out, HW) one MXU pass
    out = out + b_ref[...]                                             # bias over lanes
    o_ref[0] = out.astype(o_ref.dtype)


# ---------------------------------------------------------------------------
# Wrapper
# ---------------------------------------------------------------------------
def neigh_conv(x, weights, biases, *, neigh_number):
    """x: (B, C, H, W); weights: (c_out, neigh_number) where weights[i] =
    Conv2d_i.weight[0, :, 0, 0]; biases: (c_out,) where biases[i] = Conv2d_i.bias[0].
    Returns (B, c_out, H, W) with c_out = C - neigh_number + 1."""
    B, C, H, W = x.shape
    c_out = C - neigh_number + 1
    HW = H * W

    # Fold all sliding-window 1x1 convs into one banded matrix: M[i, i+k] = W_i[k]
    rows = jnp.arange(c_out)[:, None]                       # (c_out, 1)
    cols = rows + jnp.arange(neigh_number)[None, :]         # (c_out, neigh)
    M = jnp.zeros((c_out, C), jnp.float32).at[rows, cols].set(
        weights.astype(jnp.float32))

    xf = x.reshape(B, C, HW)                                # lane-dense spatial axis
    bcol = biases.astype(jnp.float32).reshape(c_out, 1)

    out = pl.pallas_call(
        _neigh_conv_kernel,
        out_shape=jax.ShapeDtypeStruct((B, c_out, HW), x.dtype),
        grid=(B,),
        in_specs=[
            pl.BlockSpec((1, C, HW), lambda b: (b, 0, 0)),   # per-batch activation block
            pl.BlockSpec((c_out, C), lambda b: (0, 0)),      # fused banded weights (resident)
            pl.BlockSpec((c_out, 1), lambda b: (0, 0)),      # bias column (tiny)
        ],
        out_specs=pl.BlockSpec((1, c_out, HW), lambda b: (b, 0, 0)),
        compiler_params=pltpu.CompilerParams(
            dimension_semantics=("parallel",)),              # one batch per TC on v7x
    )(xf, M, bcol)
    return out.reshape(B, c_out, H, W)


# ---------------------------------------------------------------------------
# Pure-JAX reference mirroring the PyTorch forward (per-branch conv + cat)
# ---------------------------------------------------------------------------
def neigh_conv_ref(x, weights, biases, *, neigh_number):
    B, C, H, W = x.shape
    c_out = C - neigh_number + 1
    outs = []
    for i in range(c_out):
        win = x[:, i:i + neigh_number]                                  # (B, neigh, H, W)
        o = jnp.einsum('bkhw,k->bhw', win, weights[i]) + biases[i]
        outs.append(o[:, None])
    return jnp.concatenate(outs, axis=1)                                # (B, c_out, H, W)


# ---------------------------------------------------------------------------
if __name__ == "__main__":
    # Small shapes consistent with the module: batch=2, channels=4, 16x16 spatial,
    # neigh_number=2  ->  c_out = 4 - 2 + 1 = 3.
    B, C, H, W = 2, 4, 16, 16
    neigh_number = 2
    c_out = C - neigh_number + 1

    key = jax.random.PRNGKey(0)
    kx, kw, kb = jax.random.split(key, 3)
    x = jax.random.normal(kx, (B, C, H, W), dtype=jnp.float32)
    weights = 0.3 * jax.random.normal(kw, (c_out, neigh_number), dtype=jnp.float32)
    biases = 0.1 * jax.random.normal(kb, (c_out,), dtype=jnp.float32)

    out = neigh_conv(x, weights, biases, neigh_number=neigh_number)
    out = jax.block_until_ready(out)
    assert out.shape == (B, c_out, H, W), out.shape

    ref = jax.block_until_ready(
        neigh_conv_ref(x, weights, biases, neigh_number=neigh_number))
    assert jnp.allclose(out, ref, atol=1e-5, rtol=1e-5), \
        float(jnp.max(jnp.abs(out - ref)))

    print("KERNEL_OK")
</pallas_src>

<mosaic_0001>
module attributes {stable_mosaic.version = 11 : i64} {
  func.func @_neigh_conv_kernel(%arg0: i32, %arg1: memref<1x4x256xf32, #tpu.memory_space<vmem>>, %arg2: memref<3x4xf32, #tpu.memory_space<vmem>>, %arg3: memref<3x1xf32, #tpu.memory_space<vmem>>, %arg4: memref<1x3x256xf32, #tpu.memory_space<vmem>>) attributes {dimension_semantics = [#tpu.dimension_semantics<parallel>], iteration_bounds = array<i64: 2>, scalar_prefetch = 0 : i64, scratch_operands = 0 : i64, tpu.core_type = #tpu.core_type<tc>, window_params = [{transform_indices = @transform_0, window_bounds = array<i64: 1, 4, 256>}, {pipeline_mode = #tpu.pipeline_mode<synchronous>, transform_indices = @transform_1, window_bounds = array<i64: 3, 4>}, {pipeline_mode = #tpu.pipeline_mode<synchronous>, transform_indices = @transform_2, window_bounds = array<i64: 3, 1>}, {transform_indices = @transform_3, window_bounds = array<i64: 1, 3, 256>}]} {
    %c0 = arith.constant 0 : index
    %c0_0 = arith.constant 0 : index
    %c0_1 = arith.constant 0 : index
    %0 = vector.load %arg1[%c0, %c0_0, %c0_1] : memref<1x4x256xf32, #tpu.memory_space<vmem>>, vector<1x4x256xf32>
    %1 = vector.shape_cast %0 : vector<1x4x256xf32> to vector<4x256xf32>
    %c0_2 = arith.constant 0 : index
    %c0_3 = arith.constant 0 : index
    %2 = vector.load %arg2[%c0_2, %c0_3] : memref<3x4xf32, #tpu.memory_space<vmem>>, vector<3x4xf32>
    %cst = arith.constant dense<0.000000e+00> : vector<3x256xf32>
    %3 = tpu.matmul %2, %1, %cst {dimension_numbers = #tpu.dot_dimension_numbers<[1], [0], [0], [1], [0, 0, 1, 1], [], []>} : vector<3x4xf32>, vector<4x256xf32>, vector<3x256xf32> -> vector<3x256xf32>
    %c0_4 = arith.constant 0 : index
    %c0_5 = arith.constant 0 : index
    %4 = vector.load %arg3[%c0_4, %c0_5] : memref<3x1xf32, #tpu.memory_space<vmem>>, vector<3x1xf32>
    %5 = vector.broadcast %4 : vector<3x1xf32> to vector<3x256xf32>
    %6 = arith.addf %3, %5 : vector<3x256xf32>
    %c0_6 = arith.constant 0 : index
    %c0_7 = arith.constant 0 : index
    %c0_8 = arith.constant 0 : index
    %7 = vector.load %arg4[%c0_6, %c0_7, %c0_8] : memref<1x3x256xf32, #tpu.memory_space<vmem>>, vector<1x3x256xf32>
    %8 = vector.shape_cast %7 : vector<1x3x256xf32> to vector<3x256xf32>
    %9 = vector.shape_cast %6 : vector<3x256xf32> to vector<1x3x256xf32>
    tpu.vector_store %arg4[%c0_6, %c0_7, %c0_8], %9 {strides = array<i32>} : memref<1x3x256xf32, #tpu.memory_space<vmem>>, vector<1x3x256xf32>,
    return
  }
  func.func @transform_0(%arg0: i32) -> (i32, i32, i32) {
    %c0_i32 = arith.constant 0 : i32
    %c0_i32_0 = arith.constant 0 : i32
    %c0_i32_1 = arith.constant 0 : i32
    return %arg0, %c0_i32, %c0_i32_0 : i32, i32, i32
  }
  func.func @transform_1(%arg0: i32) -> (i32, i32) {
    %c0_i32 = arith.constant 0 : i32
    %c0_i32_0 = arith.constant 0 : i32
    %c0_i32_1 = arith.constant 0 : i32
    return %c0_i32, %c0_i32_0 : i32, i32
  }
  func.func @transform_2(%arg0: i32) -> (i32, i32) {
    %c0_i32 = arith.constant 0 : i32
    %c0_i32_0 = arith.constant 0 : i32
    %c0_i32_1 = arith.constant 0 : i32
    return %c0_i32, %c0_i32_0 : i32, i32
  }
  func.func @transform_3(%arg0: i32) -> (i32, i32, i32) {
    %c0_i32 = arith.constant 0 : i32
    %c0_i32_0 = arith.constant 0 : i32
    %c0_i32_1 = arith.constant 0 : i32
    return %arg0, %c0_i32, %c0_i32_0 : i32, i32, i32
  }
}

</mosaic_0001>

<llo_original>
// kernel: tpu_custom_call.1
$region0: #{tpu_custom_call.1}
  #allocation0 [shape = 'u32[]', space=smem, size = 0x4, offset = 0x4, fixed_abs, tag = 'smem constant byte address 0x4 - core index']
  #allocation1 [shape = 'u32[144,128]{1,0:T(1,128)}', space=vmem, size = 0x12000, scoped, tag = 'internal scratch']
  %s0 = inlined_call_operand.hbm [shape: f32[2,4,256], index: 0, kind: input, shape index: {}]
  %s1 = inlined_call_operand.vmem [shape: f32[3,4], index: 1, kind: input, shape index: {}]
  %s2 = inlined_call_operand.vmem [shape: f32[3,1], index: 2, kind: input, shape index: {}]
  %s3 = inlined_call_operand.vmem [shape: f32[2,3,256], index: 3, kind: output, shape index: {}]
  %s4 = sld [smem:[#allocation0]]
  $region49: #{tpu_custom_call.1} parent=0
    _
  %s6 = ssub.s32 1, %s4
  %s7 = scalar_select 0, %s6, %s4
  $region1: #{tpu_custom_call.1} parent=0
    #allocation2 [shape = 'u8[8192]{0}', space=vmem, size = 0x2000, scoped, tag = 'input window, operand 0']
    #allocation3 [shape = 's32[2]{0}', space=sflag, size = 0x8, scoped, tag = 'scoped memory for tpu_custom_call.1']
    %8 = vsyncpa [#allocation3], 0
    %s9 = scalar_lea.sflag [#allocation3], 1
    %10 = vsyncpa %s9, 0
    loop: start=0, step=1, limit=4
    $region2: #{tpu_custom_call.1} parent=1 // loop_pre_header
      _
    $region3: #{tpu_custom_call.1} parent=1 // loop_header
      %s12 = sphi 0, %s16
      %p13 = scmp.ge.s32.totalorder %s12, 4
      %s22 = sphi 0, %s24
      %s25 = sphi 0, %s22
      %s26 = sphi 0, %s25
      %s42 = sphi 0, %s26
      %s46 = sphi 0, %s46
      %s48 = sphi 0, %s46
      %s49 = sphi 0, %s48
      %s63 = sphi 0, %s49
      %s67 = sphi 0, %s67
      %s69 = sphi 0, %s67
      %s70 = sphi 0, %s69
      %s84 = sphi 0, %s70
      %s90 = sphi 0, %s92
      %s93 = sphi 0, %s90
      %s94 = sphi 0, %s93
      %s110 = sphi 0, %s94
    $region4: #{tpu_custom_call.1} parent=1 // loop_header_branch
      %15 = sbr.rel (%p13) target = $region8
    $region5: #{tpu_custom_call.1} parent=1 // loop_body
      %s17 = ssub.s32 %s12, 1
      %s18 = ssub.s32 %s12, 2
      %s19 = sadd.s32 %s12, 1
      %s20 = ssub.s32 %s12, %s19
      %p21 = scmp.eq.s32.totalorder %s20, 0
      %s23 = sadd.s32 %s22, 1
      %s24 = scalar_select %p21, %s22, %s23
      %p27 = pneg %p21
      %p28 = scmp.eq.s32.totalorder %s12, 1
      %p29 = por %p27, %p28
      %p30 = scmp.ne.s32.totalorder %s22, %s25
      %p31 = scmp.eq.s32.totalorder %s12, 0
      %p32 = por %p30, %p31
      %p33 = scmp.ne.s32.totalorder %s22, %s25
      %p34 = scmp.eq.s32.totalorder %s17, 1
      %p35 = por %p33, %p34
      %p36 = scmp.ne.s32.totalorder %s25, %s26
      %p37 = scmp.eq.s32.totalorder %s17, 0
      %p38 = por %p36, %p37
      %p39 = scmp.ne.s32.totalorder %s25, %s26
      %p40 = scmp.eq.s32.totalorder %s18, 1
      %p41 = por %p39, %p40
      %p43 = scmp.ne.s32.totalorder %s26, %s42
      %p44 = scmp.eq.s32.totalorder %s18, 0
      %p45 = por %p43, %p44
      %s47 = sadd.s32 %s46, 1
      %p50 = scmp.eq.s32.totalorder %s12, 1
      %p51 = scmp.ne.s32.totalorder %s46, %s48
      %p52 = scmp.eq.s32.totalorder %s12, 0
      %p53 = por %p51, %p52
      %p54 = scmp.ne.s32.totalorder %s46, %s48
      %p55 = scmp.eq.s32.totalorder %s17, 1
      %p56 = por %p54, %p55
      %p57 = scmp.ne.s32.totalorder %s48, %s49
      %p58 = scmp.eq.s32.totalorder %s17, 0
      %p59 = por %p57, %p58
      %p60 = scmp.ne.s32.totalorder %s48, %s49
      %p61 = scmp.eq.s32.totalorder %s18, 1
      %p62 = por %p60, %p61
      %p64 = scmp.ne.s32.totalorder %s49, %s63
      %p65 = scmp.eq.s32.totalorder %s18, 0
      %p66 = por %p64, %p65
      %s68 = sadd.s32 %s67, 1
      %p71 = scmp.eq.s32.totalorder %s12, 1
      %p72 = scmp.ne.s32.totalorder %s67, %s69
      %p73 = scmp.eq.s32.totalorder %s12, 0
      %p74 = por %p72, %p73
      %p75 = scmp.ne.s32.totalorder %s67, %s69
      %p76 = scmp.eq.s32.totalorder %s17, 1
      %p77 = por %p75, %p76
      %p78 = scmp.ne.s32.totalorder %s69, %s70
      %p79 = scmp.eq.s32.totalorder %s17, 0
      %p80 = por %p78, %p79
      %p81 = scmp.ne.s32.totalorder %s69, %s70
      %p82 = scmp.eq.s32.totalorder %s18, 1
      %p83 = por %p81, %p82
      %p85 = scmp.ne.s32.totalorder %s70, %s84
      %p86 = scmp.eq.s32.totalorder %s18, 0
      %p87 = por %p85, %p86
      %s88 = ssub.s32 %s12, %s19
      %p89 = scmp.eq.s32.totalorder %s88, 0
      %s91 = sadd.s32 %s90, 1
      %s92 = scalar_select %p89, %s90, %s91
      %p95 = pneg %p89
      %p96 = scmp.eq.s32.totalorder %s12, 1
      %p97 = por %p95, %p96
      %p98 = scmp.ne.s32.totalorder %s90, %s93
      %p99 = scmp.eq.s32.totalorder %s12, 0
      %p100 = por %p98, %p99
      %p101 = scmp.ne.s32.totalorder %s90, %s93
      %p102 = scmp.eq.s32.totalorder %s17, 1
      %p103 = por %p101, %p102
      %p104 = scmp.ne.s32.totalorder %s93, %s94
      %p105 = scmp.eq.s32.totalorder %s17, 0
      %p106 = por %p104, %p105
      %p107 = scmp.ne.s32.totalorder %s93, %s94
      %p108 = scmp.eq.s32.totalorder %s18, 1
      %p109 = por %p107, %p108
      %p111 = scmp.ne.s32.totalorder %s94, %s110
      %p112 = scmp.eq.s32.totalorder %s18, 0
      %p113 = por %p111, %p112
      %p114 = scmp.le.s32.totalorder 1, %s12
      %p115 = scmp.lt.s32.totalorder %s12, 3
      %p116 = pnand %p114, %p115
      %p117 = pneg %p116
      // Predicated region
      $region9: #{tpu_custom_call.1} parent=5 // pred_check
        _
      $region10: #{tpu_custom_call.1} parent=5 // pred_check_branch
        %119 = sbr.rel (%p116) target = $region12
      $region11: #{tpu_custom_call.1} parent=5 // pred_region
        %s120 = ssub.s32 %s12, 1
        // Predicated region
        $region13: #{tpu_custom_call.1} parent=11 // pred_check
          %p121 = pneg %p59
        $region14: #{tpu_custom_call.1} parent=11 // pred_check_branch
          %123 = sbr.rel (%p121) target = $region16
        $region15: #{tpu_custom_call.1} parent=11 // pred_region
          _
        $region16: #{tpu_custom_call.1} parent=11 // pred_fallthru
          _
        // Predicated region
        $region17: #{tpu_custom_call.1} parent=11 // pred_check
          %p124 = pneg %p80
        $region18: #{tpu_custom_call.1} parent=11 // pred_check_branch
          %126 = sbr.rel (%p124) target = $region20
        $region19: #{tpu_custom_call.1} parent=11 // pred_region
          _
        $region20: #{tpu_custom_call.1} parent=11 // pred_fallthru
          _
      $region12: #{tpu_custom_call.1} parent=5 // pred_fallthru
        _
      %p127 = scmp.lt.s32.totalorder %s12, 2
      // Predicated region
      $region21: #{tpu_custom_call.1} parent=5 // pred_check
        %p128 = pneg %p127
      $region22: #{tpu_custom_call.1} parent=5 // pred_check_branch
        %130 = sbr.rel (%p128) target = $region24
      $region23: #{tpu_custom_call.1} parent=5 // pred_region
        // Predicated region
        $region25: #{tpu_custom_call.1} parent=23 // pred_check
          %p131 = pneg %p32
        $region26: #{tpu_custom_call.1} parent=23 // pred_check_branch
          %133 = sbr.rel (%p131) target = $region28
        $region27: #{tpu_custom_call.1} parent=23 // pred_region
          %s134 = sand.u32 %s22, 1
          %s135 = scalar_lea.sflag [#allocation3], %s134
          %s136 = sand.u32 %s22, 1
          %s137 = smul.addr %s136, 8
          %s138 = scalar_lea.vmem [#allocation2], %s137
          %s140 = ssub.s32 128, 128
          %141 = vsyncadd %s135, %s140
          %s142 = smul.addr %s12, 2
          %s143 = smul.addr %s142, 64
          %s144 = scalar_lea.hbm %s0, %s143
          %s146 = sshll.u32 %s138, 4
          %s147 = int_to_ptr.vmem [resolvable:$true] %s146
          %149 = dma.hbm_to_vmem [thread:$0]  %s144, 128, %s147, %s135
        $region28: #{tpu_custom_call.1} parent=23 // pred_fallthru
          _
      $region24: #{tpu_custom_call.1} parent=5 // pred_fallthru
        _
      %p150 = scmp.le.s32.totalorder 1, %s12
      %p151 = scmp.lt.s32.totalorder %s12, 3
      %p152 = pnand %p150, %p151
      %p153 = pneg %p152
      // Predicated region
      $region29: #{tpu_custom_call.1} parent=5 // pred_check
        _
      $region30: #{tpu_custom_call.1} parent=5 // pred_check_branch
        %155 = sbr.rel (%p152) target = $region32
      $region31: #{tpu_custom_call.1} parent=5 // pred_region
        %s156 = ssub.s32 %s12, 1
        %s157 = sand.u32 %s25, 1
        %s158 = scalar_lea.sflag [#allocation3], %s157
        %s159 = sand.u32 %s25, 1
        %s160 = smul.addr %s159, 8
        %s161 = scalar_lea.vmem [#allocation2], %s160
        // Predicated region
        $region33: #{tpu_custom_call.1} parent=31 // pred_check
          %p162 = pneg %p38
        $region34: #{tpu_custom_call.1} parent=31 // pred_check_branch
          %164 = sbr.rel (%p162) target = $region36
        $region35: #{tpu_custom_call.1} parent=31 // pred_region
          %165 = dma.done %s158, 128
        $region36: #{tpu_custom_call.1} parent=31 // pred_fallthru
          _
        %s166 = sand.u32 %s25, 1
        %s167 = scalar_lea.sflag [#allocation3], %s166
        %s168 = sand.u32 %s25, 1
        %s169 = smul.addr %s168, 8
        %s170 = scalar_lea.vmem [#allocation2], %s169
        %p171 = pneg %p38
        %p172 = pneg %p35
        %p173 = pneg %p59
        %p174 = pneg %p56
        %p175 = pneg %p80
        %p176 = pneg %p77
        %p177 = pneg %p106
        %p178 = pneg %p103
        %p179 = scmp.lt.s32.totalorder %s17, 1
        %s180 = scalar_select %p179, %s17, 1
        %s181 = smul.addr %s180, 2
        %s182 = smul.addr %s181, 4
        %s183 = scalar_lea.vmem %s3, %s182
        %p184 = scmp.lt.s32.totalorder %s17, 1
        %s185 = scalar_select %p184, %s17, 1
        %s186 = smul.addr %s185, 2
        %s187 = smul.addr %s186, 4
        %s188 = scalar_lea.vmem %s3, %s187
        %v189 = vld [vmem:[%s161] sm:$0xff]
        %v190 = vld [vmem:[%s1] sm:$0x7]
        %v191 = vld [vmem:[%s2] sm:$0x7]
        %193 = vset.pattern.permute.xlu0 0
        %194 = vperm.xlu0 %193, %v191
        %v195 = vpop.permute.xlu0 %194
        %v198 = vcombine.high %v189, %v189
        %vm199 = vcmask 31744
        %v201 = vsel %vm199, %v190, 0
        %vm203 = vcmask 1043456
        %v204 = vsel %vm203, %v189, 0
        %v206 = vsel %vm203, %v198, 0
        %208 = vmatprep.subr.mxu0 0.0
        %209 = vmatpush1.msra.mxu0 0.0
        %210 = vmatprep.subr.mxu0 0.0
        %211 = vmatpush1.msra.mxu0 0.0
        %212 = vmatprep.subr.mxu0 0.0
        %213 = vmatpush1.msra.mxu0 0.0
        %214 = vmatprep.subr.mxu0 0.0
        %215 = vmatpush1.msra.mxu0 0.0
        %216 = vmatprep.subr.mxu0 0.0
        %217 = vmatpush1.msra.mxu0 0.0
        %218 = vmatprep.subr.mxu0 0.0
        %219 = vmatpush1.msra.mxu0 0.0
        %220 = vmatprep.subr.mxu0 0.0
        %221 = vmatpush1.msra.mxu0 0.0
        %222 = vmatprep.subr.mxu0 0.0
        %223 = vmatpush1.msra.mxu0 0.0
        %224 = vmatprep.subr.mxu0 0.0
        %225 = vmatpush1.msra.mxu0 0.0
        %226 = vmatprep.subr.mxu0 0.0
        %227 = vmatpush1.msra.mxu0 0.0
        %228 = vmatprep.subr.mxu0 0.0
        %229 = vmatpush1.msra.mxu0 0.0
        %230 = vmatprep.subr.mxu0 0.0
        %231 = vmatpush1.msra.mxu0 0.0
        %232 = vmatprep.subr.mxu0 0.0
        %233 = vmatpush1.msra.mxu0 0.0
        %234 = vmatprep.subr.mxu0 0.0
        %235 = vmatpush1.msra.mxu0 0.0
        %236 = vmatprep.subr.mxu0 0.0
        %237 = vmatpush1.msra.mxu0 0.0
        %238 = vmatprep.subr.mxu0 %v206
        %239 = vmatpush1.msra.mxu0 %v204
        %240 = vmatprep.subr.mxu0 0.0
        %241 = vmatpush2.msra.mxu0 0.0
        %242 = vmatprep.subr.mxu0 0.0
        %243 = vmatpush2.msra.mxu0 0.0
        %244 = vmatprep.subr.mxu0 0.0
        %245 = vmatpush2.msra.mxu0 0.0
        %246 = vmatprep.subr.mxu0 0.0
        %247 = vmatpush2.msra.mxu0 0.0
        %248 = vmatprep.subr.mxu0 0.0
        %249 = vmatpush2.msra.mxu0 0.0
        %250 = vmatprep.subr.mxu0 0.0
        %251 = vmatpush2.msra.mxu0 0.0
        %252 = vmatprep.subr.mxu0 0.0
        %253 = vmatpush2.msra.mxu0 0.0
        %254 = vmatprep.subr.mxu0 0.0
        %255 = vmatpush2.msra.mxu0 0.0
        %256 = vmatprep.subr.mxu0 0.0
        %257 = vmatpush2.msra.mxu0 0.0
        %258 = vmatprep.subr.mxu0 0.0
        %259 = vmatpush2.msra.mxu0 0.0
        %260 = vmatprep.subr.mxu0 0.0
        %261 = vmatpush2.msra.mxu0 0.0
        %262 = vmatprep.subr.mxu0 0.0
        %263 = vmatpush2.msra.mxu0 0.0
        %264 = vmatprep.subr.mxu0 0.0
        %265 = vmatpush2.msra.mxu0 0.0
        %266 = vmatprep.subr.mxu0 0.0
        %267 = vmatpush2.msra.mxu0 0.0
        %268 = vmatprep.subr.mxu0 0.0
        %269 = vmatpush2.msra.mxu0 0.0
        %270 = vmatprep.subr.mxu0 0.0
        %271 = vmatpush2.msra.mxu0 0.0
        %272 = vmatprep.mubr.f32.mxu0 0.0
        %273 = vmatmul.mubr.f32.gmra.mxu0 %v201
        %v274 = vpop.f32.mrf.mxu0
        %v275 = vadd.f32 %v195, %v274
        %v276 = vpop.f32.mrf.mxu0
        %v277 = vadd.f32 %v195, %v276
        %278 = vdwg.mxu0
        %v281 = vcombine.low %v275, %v277
        %283 = vst [vmem:[%s188] sm:$0x77] %v281
        %p284 = scmp.lt.s32.totalorder %s17, 1
        %s285 = scalar_select %p284, %s17, 1
        %s286 = smul.addr %s285, 2
        %s287 = smul.addr %s286, 4
        %s288 = scalar_lea.vmem %s3, %s287
        // Predicated region
        $region37: #{tpu_custom_call.1} parent=31 // pred_check
          %p289 = pneg %p103
        $region38: #{tpu_custom_call.1} parent=31 // pred_check_branch
          %291 = sbr.rel (%p289) target = $region40
        $region39: #{tpu_custom_call.1} parent=31 // pred_region
          _
        $region40: #{tpu_custom_call.1} parent=31 // pred_fallthru
          _
      $region32: #{tpu_custom_call.1} parent=5 // pred_fallthru
        _
      %p292 = scmp.le.s32.totalorder 2, %s12
      // Predicated region
      $region41: #{tpu_custom_call.1} parent=5 // pred_check
        %p293 = pneg %p292
      $region42: #{tpu_custom_call.1} parent=5 // pred_check_branch
        %295 = sbr.rel (%p293) target = $region44
      $region43: #{tpu_custom_call.1} parent=5 // pred_region
        %s296 = ssub.s32 %s12, 2
        // Predicated region
        $region45: #{tpu_custom_call.1} parent=43 // pred_check
          %p297 = pneg %p109
        $region46: #{tpu_custom_call.1} parent=43 // pred_check_branch
          %299 = sbr.rel (%p297) target = $region48
        $region47: #{tpu_custom_call.1} parent=43 // pred_region
          %p300 = scmp.lt.s32.totalorder %s18, 1
          %s301 = scalar_select %p300, %s18, 1
          %s302 = smul.addr %s301, 2
          %s303 = smul.addr %s302, 4
          %s304 = scalar_lea.vmem %s3, %s303
        $region48: #{tpu_custom_call.1} parent=43 // pred_fallthru
          _
      $region44: #{tpu_custom_call.1} parent=5 // pred_fallthru
        _
    $region6: #{tpu_custom_call.1} parent=1 // loop_footer
      %s16 = sadd.s32 1, %s12
    $region7: #{tpu_custom_call.1} parent=1 // loop_footer_branch
      %11 = sbr.rel target = $region3
    $region8: #{tpu_custom_call.1} parent=1 // loop_exit
      _
    %305 = vsyncpa [#allocation3], 1
    %s306 = scalar_lea.sflag [#allocation3], 1
    %307 = vsyncpa %s306, 1

</llo_original>
